<compile_context>
chip_gen: v6e
topology: v6e:2x2x1
jax: 0.10.0
libtpu: 0.0.40
codegen_flags: <defaults>
</compile_context>

<pallas_src>
import jax
import jax.numpy as jnp
from jax.experimental import pallas as pl
from jax.experimental.pallas import tpu as pltpu

_LANE = 128
_TWO_PI = 6.283185307179586
_INV_2_23 = 1.0 / 8388608.0  # 2^-23


def _round_up(x, n):
    return ((x + n - 1) // n) * n


def _fmix32(x):
    # murmur3 finalizer: full-avalanche 32-bit mixer (pure 32-bit int ops).
    x = x ^ (x >> 16)
    x = x * jnp.uint32(0x85EBCA6B)
    x = x ^ (x >> 13)
    x = x * jnp.uint32(0xC2B2AE35)
    x = x ^ (x >> 16)
    return x


def _gauss_noise_mul_kernel(seed_ref, alpha_ref, emb_ref, oi_ref, oj_ref):
    block_m, lane = emb_ref.shape

    # Global flat element index for this tile (counter for the hash PRNG).
    base = (pl.program_id(0) * (block_m * lane)).astype(jnp.uint32)
    row = jax.lax.broadcasted_iota(jnp.int32, (block_m, lane), 0).astype(jnp.uint32)
    col = jax.lax.broadcasted_iota(jnp.int32, (block_m, lane), 1).astype(jnp.uint32)
    ctr = base + row * jnp.uint32(lane) + col

    # Two independent streams derived from (seed, stream_id).
    seed = seed_ref[0].astype(jnp.uint32)
    key_i = _fmix32(seed ^ jnp.uint32(0x3C6EF372))
    key_j = _fmix32(seed ^ jnp.uint32(0x9E3779B9))
    golden = jnp.uint32(0x9E3779B9)

    bits_i = _fmix32(ctr * golden + key_i)
    bits_j = _fmix32(ctr * golden + key_j)

    # Top 23 bits -> uniforms; u1 in (0, 1] so log() never sees 0.
    u1 = ((bits_i >> 9).astype(jnp.float32) + 1.0) * _INV_2_23
    u2 = (bits_j >> 9).astype(jnp.float32) * _INV_2_23

    # Box-Muller: (r*cos(theta), r*sin(theta)) are two independent N(0,1).
    # Fold alpha into r so it is applied once.
    alpha = alpha_ref[0]
    r = jnp.sqrt(-2.0 * jnp.log(u1)) * alpha
    theta = _TWO_PI * u2
    z_i = r * jnp.cos(theta)
    z_j = r * jnp.sin(theta)

    emb = emb_ref[...].astype(jnp.float32)
    oi_ref[...] = (emb * z_i).astype(oi_ref.dtype)
    oj_ref[...] = (emb * z_j).astype(oj_ref.dtype)


def gauss_time_noise_pn(emb, seed, alpha=1.0, block_m=1024):
    """Returns (emb * z_i, emb * z_j) with z ~ N(0, alpha^2), same shape/dtype as emb."""
    orig_shape = emb.shape
    dtype = emb.dtype
    total = emb.size

    # Flatten to a lane-dense (m, 128) slab; pad so block_m divides m.
    m_raw = pl.cdiv(total, _LANE)
    bm = min(block_m, _round_up(m_raw, 32))   # mult of 32: valid tiling for f32/bf16/i8
    m = _round_up(m_raw, bm)
    padded_total = m * _LANE

    flat = emb.reshape(-1)
    if padded_total != total:
        flat = jnp.pad(flat, (0, padded_total - total))
    x = flat.reshape(m, _LANE)                # native dtype end-to-end

    seed_arr = jnp.asarray([seed], dtype=jnp.int32)
    alpha_arr = jnp.asarray([alpha], dtype=jnp.float32)

    blk = pl.BlockSpec((bm, _LANE), lambda i: (i, 0))
    oi, oj = pl.pallas_call(
        _gauss_noise_mul_kernel,
        out_shape=[
            jax.ShapeDtypeStruct((m, _LANE), dtype),
            jax.ShapeDtypeStruct((m, _LANE), dtype),
        ],
        grid_spec=pltpu.PrefetchScalarGridSpec(
            num_scalar_prefetch=0,
            grid=(m // bm,),
            in_specs=[
                pl.BlockSpec(memory_space=pltpu.MemorySpace.SMEM),  # seed
                pl.BlockSpec(memory_space=pltpu.MemorySpace.SMEM),  # alpha
                blk,                                                # emb tile
            ],
            out_specs=[blk, blk],
        ),
        compiler_params=pltpu.CompilerParams(
            dimension_semantics=("parallel",)),
    )(seed_arr, alpha_arr, x)

    out_i = oi.reshape(-1)[:total].reshape(orig_shape)
    out_j = oj.reshape(-1)[:total].reshape(orig_shape)
    return out_i, out_j


if __name__ == "__main__":
    key = jax.random.PRNGKey(0)
    # NCHW input, small shape consistent with an embedding/feature map.
    emb = jax.random.normal(key, (2, 4, 16, 16), dtype=jnp.float32)

    out_i, out_j = gauss_time_noise_pn(emb, seed=0, alpha=1.0)
    jax.block_until_ready((out_i, out_j))

    # Sanity: outputs match input shape/dtype and the two branches differ.
    assert out_i.shape == emb.shape and out_j.shape == emb.shape
    assert out_i.dtype == emb.dtype and out_j.dtype == emb.dtype
    assert not bool(jnp.allclose(out_i, out_j))

    print("KERNEL_OK")
</pallas_src>

<mosaic_0001>
module attributes {stable_mosaic.version = 11 : i64} {
  func.func @_gauss_noise_mul_kernel(%arg0: i32, %arg1: memref<1xi32, #tpu.memory_space<smem>>, %arg2: memref<1xf32, #tpu.memory_space<smem>>, %arg3: memref<32x128xf32, #tpu.memory_space<vmem>>, %arg4: memref<32x128xf32, #tpu.memory_space<vmem>>, %arg5: memref<32x128xf32, #tpu.memory_space<vmem>>) attributes {dimension_semantics = [#tpu.dimension_semantics<parallel>], iteration_bounds = array<i64: 1>, scalar_prefetch = 0 : i64, scratch_operands = 0 : i64, tpu.core_type = #tpu.core_type<tc>, window_params = [{transform_indices = @transform_0, window_bounds = array<i64: 1>}, {transform_indices = @transform_1, window_bounds = array<i64: 1>}, {transform_indices = @transform_2, window_bounds = array<i64: 32, 128>}, {transform_indices = @transform_3, window_bounds = array<i64: 32, 128>}, {transform_indices = @transform_4, window_bounds = array<i64: 32, 128>}]} {
    %c4096_i32 = arith.constant 4096 : i32
    %0 = arith.muli %arg0, %c4096_i32 : i32
    %1 = tpu.iota {dimensions = array<i32: 0>} : vector<32x128xi32>
    %2 = tpu.iota {dimensions = array<i32: 1>} : vector<32x128xi32>
    %c128_i32 = arith.constant 128 : i32
    %3 = vector.broadcast %c128_i32 : i32 to vector<32x128xi32>
    %4 = arith.muli %1, %3 : vector<32x128xi32>
    %5 = vector.broadcast %0 : i32 to vector<32x128xi32>
    %6 = arith.addi %5, %4 : vector<32x128xi32>
    %7 = arith.addi %6, %2 : vector<32x128xi32>
    %c0 = arith.constant 0 : index
    %8 = memref.load %arg1[%c0] : memref<1xi32, #tpu.memory_space<smem>>
    %c1013904242_i32 = arith.constant 1013904242 : i32
    %9 = arith.xori %8, %c1013904242_i32 : i32
    %c16_i32 = arith.constant 16 : i32
    %10 = arith.shrui %9, %c16_i32 : i32
    %11 = arith.xori %9, %10 : i32
    %c-2048144789_i32 = arith.constant -2048144789 : i32
    %12 = arith.muli %11, %c-2048144789_i32 : i32
    %c13_i32 = arith.constant 13 : i32
    %13 = arith.shrui %12, %c13_i32 : i32
    %14 = arith.xori %12, %13 : i32
    %c-1028477387_i32 = arith.constant -1028477387 : i32
    %15 = arith.muli %14, %c-1028477387_i32 : i32
    %c16_i32_0 = arith.constant 16 : i32
    %16 = arith.shrui %15, %c16_i32_0 : i32
    %17 = arith.xori %15, %16 : i32
    %c-1640531527_i32 = arith.constant -1640531527 : i32
    %18 = arith.xori %8, %c-1640531527_i32 : i32
    %c16_i32_1 = arith.constant 16 : i32
    %19 = arith.shrui %18, %c16_i32_1 : i32
    %20 = arith.xori %18, %19 : i32
    %c-2048144789_i32_2 = arith.constant -2048144789 : i32
    %21 = arith.muli %20, %c-2048144789_i32_2 : i32
    %c13_i32_3 = arith.constant 13 : i32
    %22 = arith.shrui %21, %c13_i32_3 : i32
    %23 = arith.xori %21, %22 : i32
    %c-1028477387_i32_4 = arith.constant -1028477387 : i32
    %24 = arith.muli %23, %c-1028477387_i32_4 : i32
    %c16_i32_5 = arith.constant 16 : i32
    %25 = arith.shrui %24, %c16_i32_5 : i32
    %26 = arith.xori %24, %25 : i32
    %c-1640531527_i32_6 = arith.constant -1640531527 : i32
    %27 = vector.broadcast %c-1640531527_i32_6 : i32 to vector<32x128xi32>
    %28 = arith.muli %7, %27 : vector<32x128xi32>
    %29 = vector.broadcast %17 : i32 to vector<32x128xi32>
    %30 = arith.addi %28, %29 : vector<32x128xi32>
    %c16_i32_7 = arith.constant 16 : i32
    %31 = vector.broadcast %c16_i32_7 : i32 to vector<32x128xi32>
    %32 = arith.shrui %30, %31 : vector<32x128xi32>
    %33 = arith.xori %30, %32 : vector<32x128xi32>
    %c-2048144789_i32_8 = arith.constant -2048144789 : i32
    %34 = vector.broadcast %c-2048144789_i32_8 : i32 to vector<32x128xi32>
    %35 = arith.muli %33, %34 : vector<32x128xi32>
    %c13_i32_9 = arith.constant 13 : i32
    %36 = vector.broadcast %c13_i32_9 : i32 to vector<32x128xi32>
    %37 = arith.shrui %35, %36 : vector<32x128xi32>
    %38 = arith.xori %35, %37 : vector<32x128xi32>
    %c-1028477387_i32_10 = arith.constant -1028477387 : i32
    %39 = vector.broadcast %c-1028477387_i32_10 : i32 to vector<32x128xi32>
    %40 = arith.muli %38, %39 : vector<32x128xi32>
    %c16_i32_11 = arith.constant 16 : i32
    %41 = vector.broadcast %c16_i32_11 : i32 to vector<32x128xi32>
    %42 = arith.shrui %40, %41 : vector<32x128xi32>
    %43 = arith.xori %40, %42 : vector<32x128xi32>
    %c-1640531527_i32_12 = arith.constant -1640531527 : i32
    %44 = vector.broadcast %c-1640531527_i32_12 : i32 to vector<32x128xi32>
    %45 = arith.muli %7, %44 : vector<32x128xi32>
    %46 = vector.broadcast %26 : i32 to vector<32x128xi32>
    %47 = arith.addi %45, %46 : vector<32x128xi32>
    %c16_i32_13 = arith.constant 16 : i32
    %48 = vector.broadcast %c16_i32_13 : i32 to vector<32x128xi32>
    %49 = arith.shrui %47, %48 : vector<32x128xi32>
    %50 = arith.xori %47, %49 : vector<32x128xi32>
    %c-2048144789_i32_14 = arith.constant -2048144789 : i32
    %51 = vector.broadcast %c-2048144789_i32_14 : i32 to vector<32x128xi32>
    %52 = arith.muli %50, %51 : vector<32x128xi32>
    %c13_i32_15 = arith.constant 13 : i32
    %53 = vector.broadcast %c13_i32_15 : i32 to vector<32x128xi32>
    %54 = arith.shrui %52, %53 : vector<32x128xi32>
    %55 = arith.xori %52, %54 : vector<32x128xi32>
    %c-1028477387_i32_16 = arith.constant -1028477387 : i32
    %56 = vector.broadcast %c-1028477387_i32_16 : i32 to vector<32x128xi32>
    %57 = arith.muli %55, %56 : vector<32x128xi32>
    %c16_i32_17 = arith.constant 16 : i32
    %58 = vector.broadcast %c16_i32_17 : i32 to vector<32x128xi32>
    %59 = arith.shrui %57, %58 : vector<32x128xi32>
    %60 = arith.xori %57, %59 : vector<32x128xi32>
    %c9_i32 = arith.constant 9 : i32
    %61 = vector.broadcast %c9_i32 : i32 to vector<32x128xi32>
    %62 = arith.shrui %43, %61 : vector<32x128xi32>
    %63 = arith.uitofp %62 : vector<32x128xi32> to vector<32x128xf32>
    %cst = arith.constant 1.000000e+00 : f32
    %64 = vector.broadcast %cst : f32 to vector<32x128xf32>
    %65 = arith.addf %63, %64 : vector<32x128xf32>
    %cst_18 = arith.constant 1.1920929E-7 : f32
    %66 = vector.broadcast %cst_18 : f32 to vector<32x128xf32>
    %67 = arith.mulf %65, %66 : vector<32x128xf32>
    %c9_i32_19 = arith.constant 9 : i32
    %68 = vector.broadcast %c9_i32_19 : i32 to vector<32x128xi32>
    %69 = arith.shrui %60, %68 : vector<32x128xi32>
    %70 = arith.uitofp %69 : vector<32x128xi32> to vector<32x128xf32>
    %cst_20 = arith.constant 1.1920929E-7 : f32
    %71 = vector.broadcast %cst_20 : f32 to vector<32x128xf32>
    %72 = arith.mulf %70, %71 : vector<32x128xf32>
    %c0_21 = arith.constant 0 : index
    %73 = memref.load %arg2[%c0_21] : memref<1xf32, #tpu.memory_space<smem>>
    %74 = math.log %67 : vector<32x128xf32>
    %cst_22 = arith.constant -2.000000e+00 : f32
    %75 = vector.broadcast %cst_22 : f32 to vector<32x128xf32>
    %76 = arith.mulf %75, %74 : vector<32x128xf32>
    %77 = math.sqrt %76 : vector<32x128xf32>
    %78 = vector.broadcast %73 : f32 to vector<32x128xf32>
    %79 = arith.mulf %77, %78 : vector<32x128xf32>
    %cst_23 = arith.constant 6.28318548 : f32
    %80 = vector.broadcast %cst_23 : f32 to vector<32x128xf32>
    %81 = arith.mulf %80, %72 : vector<32x128xf32>
    %82 = math.cos %81 : vector<32x128xf32>
    %83 = arith.mulf %79, %82 : vector<32x128xf32>
    %84 = math.sin %81 : vector<32x128xf32>
    %85 = arith.mulf %79, %84 : vector<32x128xf32>
    %c0_24 = arith.constant 0 : index
    %c0_25 = arith.constant 0 : index
    %86 = vector.load %arg3[%c0_24, %c0_25] : memref<32x128xf32, #tpu.memory_space<vmem>>, vector<32x128xf32>
    %87 = arith.mulf %86, %83 : vector<32x128xf32>
    %c0_26 = arith.constant 0 : index
    %c0_27 = arith.constant 0 : index
    %88 = vector.load %arg4[%c0_26, %c0_27] : memref<32x128xf32, #tpu.memory_space<vmem>>, vector<32x128xf32>
    tpu.vector_store %arg4[%c0_26, %c0_27], %87 {strides = array<i32>} : memref<32x128xf32, #tpu.memory_space<vmem>>, vector<32x128xf32>,
    %89 = arith.mulf %86, %85 : vector<32x128xf32>
    %c0_28 = arith.constant 0 : index
    %c0_29 = arith.constant 0 : index
    %90 = vector.load %arg5[%c0_28, %c0_29] : memref<32x128xf32, #tpu.memory_space<vmem>>, vector<32x128xf32>
    tpu.vector_store %arg5[%c0_28, %c0_29], %89 {strides = array<i32>} : memref<32x128xf32, #tpu.memory_space<vmem>>, vector<32x128xf32>,
    return
  }
  func.func @transform_0(%arg0: i32) -> i32 {
    %c0_i32 = arith.constant 0 : i32
    %c0_i32_0 = arith.constant 0 : i32
    return %c0_i32 : i32
  }
  func.func @transform_1(%arg0: i32) -> i32 {
    %c0_i32 = arith.constant 0 : i32
    %c0_i32_0 = arith.constant 0 : i32
    return %c0_i32 : i32
  }
  func.func @transform_2(%arg0: i32) -> (i32, i32) {
    %c0_i32 = arith.constant 0 : i32
    %c0_i32_0 = arith.constant 0 : i32
    return %arg0, %c0_i32 : i32, i32
  }
  func.func @transform_3(%arg0: i32) -> (i32, i32) {
    %c0_i32 = arith.constant 0 : i32
    %c0_i32_0 = arith.constant 0 : i32
    return %arg0, %c0_i32 : i32, i32
  }
  func.func @transform_4(%arg0: i32) -> (i32, i32) {
    %c0_i32 = arith.constant 0 : i32
    %c0_i32_0 = arith.constant 0 : i32
    return %arg0, %c0_i32 : i32, i32
  }
}

</mosaic_0001>

<llo_original>
// kernel: tpu_custom_call.1
$region0: #{tpu_custom_call.1}
  #allocation0 [shape = 'u32[]', space=smem, size = 0x4, offset = 0x4, fixed_abs, tag = 'smem constant byte address 0x4 - core index']
  #allocation1 [shape = 'u32[144,128]{1,0:T(1,128)}', space=vmem, size = 0x12000, scoped, tag = 'internal scratch']
  #allocation2 [shape = 's32[1]{0:T(128)S(6)}', space=smem, size = 0x200, scoped, tag = 'scoped memory for tpu_custom_call.1']
  #allocation3 [shape = 'f32[1]{0:T(128)S(6)}', space=smem, size = 0x200, scoped, tag = 'scoped memory for tpu_custom_call.1']
  %s0 = inlined_call_operand.<no memory space> [shape: s32[1], index: 0, kind: input, shape index: {}]
  %s1 = inlined_call_operand.<no memory space> [shape: f32[1], index: 1, kind: input, shape index: {}]
  %s2 = inlined_call_operand.hbm [shape: f32[32,128], index: 2, kind: input, shape index: {}]
  %s3 = inlined_call_operand.hbm [shape: f32[32,128], index: 3, kind: output, shape index: {0}]
  %s4 = inlined_call_operand.hbm [shape: f32[32,128], index: 4, kind: output, shape index: {1}]
  %5 = xla_tuple %s3, %s4
  %s6 = sld [smem:[#allocation0]]
  $region34: #{tpu_custom_call.1} parent=0
    _
  %s8 = ssub.s32 1, %s6
  %s9 = scalar_select 0, %s8, %s6
  %10 = sst [smem:[#allocation2]] %s0
  %11 = sst [smem:[#allocation3]] %s1
  $region1: #{tpu_custom_call.1} parent=0
    #allocation4 [shape = 'u8[16384]{0}', space=vmem, size = 0x4000, scoped, tag = 'input window, operand 2, single buffered']
    #allocation5 [shape = 's32[1]{0}', space=sflag, size = 0x4, scoped, tag = 'scoped memory for tpu_custom_call.1']
    #allocation6 [shape = 's32[1]{0}', space=sflag, size = 0x4, scoped, tag = 'scoped memory for tpu_custom_call.1']
    #allocation7 [shape = 'u8[16384]{0}', space=vmem, size = 0x4000, scoped, tag = 'output window, operand 0, single buffered']
    #allocation8 [shape = 'u8[16384]{0}', space=vmem, size = 0x4000, scoped, tag = 'output window, operand 1, single buffered']
    #allocation9 [shape = 's32[1]{0}', space=sflag, size = 0x4, scoped, tag = 'scoped memory for tpu_custom_call.1']
    %12 = vsyncpa [#allocation5], 0
    %13 = vsyncpa [#allocation6], 0
    %14 = vsyncpa [#allocation9], 0
    // Predicated region
    $region2: #{tpu_custom_call.1} parent=1 // pred_check
      _
    $region3: #{tpu_custom_call.1} parent=1 // pred_check_branch
      %16 = sbr.rel (0) target = $region5
    $region4: #{tpu_custom_call.1} parent=1 // pred_region
      _
    $region5: #{tpu_custom_call.1} parent=1 // pred_fallthru
      _
    // Predicated region
    $region6: #{tpu_custom_call.1} parent=1 // pred_check
      _
    $region7: #{tpu_custom_call.1} parent=1 // pred_check_branch
      %18 = sbr.rel (0) target = $region9
    $region8: #{tpu_custom_call.1} parent=1 // pred_region
      _
    $region9: #{tpu_custom_call.1} parent=1 // pred_fallthru
      _
    // Predicated region
    $region10: #{tpu_custom_call.1} parent=1 // pred_check
      _
    $region11: #{tpu_custom_call.1} parent=1 // pred_check_branch
      %20 = sbr.rel (0) target = $region13
    $region12: #{tpu_custom_call.1} parent=1 // pred_region
      %s22 = ssub.s32 512, 512
      %23 = vsyncadd [#allocation5], %s22
      %s24 = sshll.u32 [#allocation4], 4
      %s25 = int_to_ptr.vmem [resolvable:$true] %s24
      %30 = dma.hbm_to_vmem [thread:$0]  %s2, 512, %s25, [#allocation5], 128, 128, 8
    $region13: #{tpu_custom_call.1} parent=1 // pred_fallthru
      _
    // Predicated region
    $region14: #{tpu_custom_call.1} parent=1 // pred_check
      _
    $region15: #{tpu_custom_call.1} parent=1 // pred_check_branch
      %32 = sbr.rel (0) target = $region17
    $region16: #{tpu_custom_call.1} parent=1 // pred_region
      %33 = dma.done [#allocation5], 512
    $region17: #{tpu_custom_call.1} parent=1 // pred_fallthru
      _
    %s34 = smul.u32 0, 4096
    %v35 = vlaneseq
    %v36 = vshrl.u32 %v35, 7
    %v37 = vadd.s32 %v36, 8
    %v38 = vadd.s32 %v36, 16
    %v39 = vadd.s32 %v36, 24
    %v40 = vlaneseq
    %v41 = vand.u32 %v40, 127
    %v42 = vmul.u32 %v36, 128
    %v43 = vmul.u32 %v37, 128
    %v44 = vmul.u32 %v38, 128
    %v45 = vmul.u32 %v39, 128
    %v46 = vstv %s34
    %v47 = vadd.s32 %v46, %v42
    %v48 = vadd.s32 %v46, %v43
    %v49 = vadd.s32 %v46, %v44
    %v50 = vadd.s32 %v46, %v45
    %v51 = vadd.s32 %v47, %v41
    %v52 = vadd.s32 %v48, %v41
    %v53 = vadd.s32 %v49, %v41
    %v54 = vadd.s32 %v50, %v41
    %s55 = sld [smem:[#allocation2]]
    %s56 = sxor.u32 %s55, 1013904242
    %s57 = sshrl.u32 %s56, 16
    %s58 = sxor.u32 %s56, %s57
    %s59 = smul.u32 %s58, 2246822507
    %s60 = sshrl.u32 %s59, 13
    %s61 = sxor.u32 %s59, %s60
    %s62 = smul.u32 %s61, 3266489909
    %s63 = sshrl.u32 %s62, 16
    %s64 = sxor.u32 %s62, %s63
    %s65 = sxor.u32 %s55, 2654435769
    %s66 = sshrl.u32 %s65, 16
    %s67 = sxor.u32 %s65, %s66
    %s68 = smul.u32 %s67, 2246822507
    %s69 = sshrl.u32 %s68, 13
    %s70 = sxor.u32 %s68, %s69
    %s71 = smul.u32 %s70, 3266489909
    %s72 = sshrl.u32 %s71, 16
    %s73 = sxor.u32 %s71, %s72
    %v74 = vmul.u32 %v51, 2654435769
    %v75 = vmul.u32 %v52, 2654435769
    %v76 = vmul.u32 %v53, 2654435769
    %v77 = vmul.u32 %v54, 2654435769
    %v78 = vstv %s64
    %v79 = vadd.s32 %v74, %v78
    %v80 = vadd.s32 %v75, %v78
    %v81 = vadd.s32 %v76, %v78
    %v82 = vadd.s32 %v77, %v78
    %v83 = vshrl.u32 %v79, 16
    %v84 = vshrl.u32 %v80, 16
    %v85 = vshrl.u32 %v81, 16
    %v86 = vshrl.u32 %v82, 16
    %v87 = vxor.u32 %v79, %v83
    %v88 = vxor.u32 %v80, %v84
    %v89 = vxor.u32 %v81, %v85
    %v90 = vxor.u32 %v82, %v86
    %v91 = vmul.u32 %v87, 2246822507
    %v92 = vmul.u32 %v88, 2246822507
    %v93 = vmul.u32 %v89, 2246822507
    %v94 = vmul.u32 %v90, 2246822507
    %v95 = vshrl.u32 %v91, 13
    %v96 = vshrl.u32 %v92, 13
    %v97 = vshrl.u32 %v93, 13
    %v98 = vshrl.u32 %v94, 13
    %v99 = vxor.u32 %v91, %v95
    %v100 = vxor.u32 %v92, %v96
    %v101 = vxor.u32 %v93, %v97
    %v102 = vxor.u32 %v94, %v98
    %v103 = vmul.u32 %v99, 3266489909
    %v104 = vmul.u32 %v100, 3266489909
    %v105 = vmul.u32 %v101, 3266489909
    %v106 = vmul.u32 %v102, 3266489909
    %v107 = vshrl.u32 %v103, 16
    %v108 = vshrl.u32 %v104, 16
    %v109 = vshrl.u32 %v105, 16
    %v110 = vshrl.u32 %v106, 16
    %v111 = vxor.u32 %v103, %v107
    %v112 = vxor.u32 %v104, %v108
    %v113 = vxor.u32 %v105, %v109
    %v114 = vxor.u32 %v106, %v110
    %v115 = vstv %s73
    %v116 = vadd.s32 %v74, %v115
    %v117 = vadd.s32 %v75, %v115
    %v118 = vadd.s32 %v76, %v115
    %v119 = vadd.s32 %v77, %v115
    %v120 = vshrl.u32 %v116, 16
    %v121 = vshrl.u32 %v117, 16
    %v122 = vshrl.u32 %v118, 16
    %v123 = vshrl.u32 %v119, 16
    %v124 = vxor.u32 %v116, %v120
    %v125 = vxor.u32 %v117, %v121
    %v126 = vxor.u32 %v118, %v122
    %v127 = vxor.u32 %v119, %v123
    %v128 = vmul.u32 %v124, 2246822507
    %v129 = vmul.u32 %v125, 2246822507
    %v130 = vmul.u32 %v126, 2246822507
    %v131 = vmul.u32 %v127, 2246822507
    %v132 = vshrl.u32 %v128, 13
    %v133 = vshrl.u32 %v129, 13
    %v134 = vshrl.u32 %v130, 13
    %v135 = vshrl.u32 %v131, 13
    %v136 = vxor.u32 %v128, %v132
    %v137 = vxor.u32 %v129, %v133
    %v138 = vxor.u32 %v130, %v134
    %v139 = vxor.u32 %v131, %v135
    %v140 = vmul.u32 %v136, 3266489909
    %v141 = vmul.u32 %v137, 3266489909
    %v142 = vmul.u32 %v138, 3266489909
    %v143 = vmul.u32 %v139, 3266489909
    %v144 = vshrl.u32 %v140, 16
    %v145 = vshrl.u32 %v141, 16
    %v146 = vshrl.u32 %v142, 16
    %v147 = vshrl.u32 %v143, 16
    %v148 = vxor.u32 %v140, %v144
    %v149 = vxor.u32 %v141, %v145
    %v150 = vxor.u32 %v142, %v146
    %v151 = vxor.u32 %v143, %v147
    %v152 = vshrl.u32 %v111, 9
    %v153 = vshrl.u32 %v112, 9
    %v154 = vshrl.u32 %v113, 9
    %v155 = vshrl.u32 %v114, 9
    %v156 = vshrl.u32 %v152, 16
    %v157 = vand.u32 %v152, 65535
    %v158 = vcvt.s32.f32 %v156
    %v159 = vmul.f32 %v158, 65536.0
    %v160 = vcvt.s32.f32 %v157
    %v161 = vadd.f32 %v159, %v160
    %v162 = vshrl.u32 %v153, 16
    %v163 = vand.u32 %v153, 65535
    %v164 = vcvt.s32.f32 %v162
    %v165 = vmul.f32 %v164, 65536.0
    %v166 = vcvt.s32.f32 %v163
    %v167 = vadd.f32 %v165, %v166
    %v168 = vshrl.u32 %v154, 16
    %v169 = vand.u32 %v154, 65535
    %v170 = vcvt.s32.f32 %v168
    %v171 = vmul.f32 %v170, 65536.0
    %v172 = vcvt.s32.f32 %v169
    %v173 = vadd.f32 %v171, %v172
    %v174 = vshrl.u32 %v155, 16
    %v175 = vand.u32 %v155, 65535
    %v176 = vcvt.s32.f32 %v174
    %v177 = vmul.f32 %v176, 65536.0
    %v178 = vcvt.s32.f32 %v175
    %v179 = vadd.f32 %v177, %v178
    %v180 = vadd.f32 %v161, 1.0
    %v181 = vadd.f32 %v167, 1.0
    %v182 = vadd.f32 %v173, 1.0
    %v183 = vadd.f32 %v179, 1.0
    %v184 = vmul.f32 %v180, 1.1920929e-07
    %v185 = vmul.f32 %v181, 1.1920929e-07
    %v186 = vmul.f32 %v182, 1.1920929e-07
    %v187 = vmul.f32 %v183, 1.1920929e-07
    %v188 = vshrl.u32 %v148, 9
    %v189 = vshrl.u32 %v149, 9
    %v190 = vshrl.u32 %v150, 9
    %v191 = vshrl.u32 %v151, 9
    %v192 = vshrl.u32 %v188, 16
    %v193 = vand.u32 %v188, 65535
    %v194 = vcvt.s32.f32 %v192
    %v195 = vmul.f32 %v194, 65536.0
    %v196 = vcvt.s32.f32 %v193
    %v197 = vadd.f32 %v195, %v196
    %v198 = vshrl.u32 %v189, 16
    %v199 = vand.u32 %v189, 65535
    %v200 = vcvt.s32.f32 %v198
    %v201 = vmul.f32 %v200, 65536.0
    %v202 = vcvt.s32.f32 %v199
    %v203 = vadd.f32 %v201, %v202
    %v204 = vshrl.u32 %v190, 16
    %v205 = vand.u32 %v190, 65535
    %v206 = vcvt.s32.f32 %v204
    %v207 = vmul.f32 %v206, 65536.0
    %v208 = vcvt.s32.f32 %v205
    %v209 = vadd.f32 %v207, %v208
    %v210 = vshrl.u32 %v191, 16
    %v211 = vand.u32 %v191, 65535
    %v212 = vcvt.s32.f32 %v210
    %v213 = vmul.f32 %v212, 65536.0
    %v214 = vcvt.s32.f32 %v211
    %v215 = vadd.f32 %v213, %v214
    %v216 = vmul.f32 %v197, 1.1920929e-07
    %v217 = vmul.f32 %v203, 1.1920929e-07
    %v218 = vmul.f32 %v209, 1.1920929e-07
    %v219 = vmul.f32 %v215, 1.1920929e-07
    %s220 = sld [smem:[#allocation3]]
    %v221 = vlog2.pop %v184
    %v222 = vmul.f32 %v221, 0.6931472
    %v223 = vlog2.pop %v185
    %v224 = vmul.f32 %v223, 0.6931472
    %v225 = vlog2.pop %v186
    %v226 = vmul.f32 %v225, 0.6931472
    %v227 = vlog2.pop %v187
    %v228 = vmul.f32 %v227, 0.6931472
    %v229 = vmul.f32 %v222, -2.0
    %v230 = vmul.f32 %v224, -2.0
    %v231 = vmul.f32 %v226, -2.0
    %v232 = vmul.f32 %v228, -2.0
    %v233 = vrsqrt.pop %v229
    %v234 = vmul.f32 %v229, %v233
    %vm235 = vcmp.eq.f32.partialorder %v229, inf
    %v236 = vsel %vm235, %v229, %v234
    %vm237 = vcmp.eq.f32.partialorder %v229, 0.0
    %v238 = vand.u32 %v229, 2147483648
    %v239 = vsel %vm237, %v238, %v236
    %v240 = vrsqrt.pop %v230
    %v241 = vmul.f32 %v230, %v240
    %vm242 = vcmp.eq.f32.partialorder %v230, inf
    %v243 = vsel %vm242, %v230, %v241
    %vm244 = vcmp.eq.f32.partialorder %v230, 0.0
    %v245 = vand.u32 %v230, 2147483648
    %v246 = vsel %vm244, %v245, %v243
    %v247 = vrsqrt.pop %v231
    %v248 = vmul.f32 %v231, %v247
    %vm249 = vcmp.eq.f32.partialorder %v231, inf
    %v250 = vsel %vm249, %v231, %v248
    %vm251 = vcmp.eq.f32.partialorder %v231, 0.0
    %v252 = vand.u32 %v231, 2147483648
    %v253 = vsel %vm251, %v252, %v250
    %v254 = vrsqrt.pop %v232
    %v255 = vmul.f32 %v232, %v254
    %vm256 = vcmp.eq.f32.partialorder %v232, inf
    %v257 = vsel %vm256, %v232, %v255
    %vm258 = vcmp.eq.f32.partialorder %v232, 0.0
    %v259 = vand.u32 %v232, 2147483648
    %v260 = vsel %vm258, %v259, %v257
    %v261 = vstv %s220
    %v262 = vmul.f32 %v239, %v261
    %v263 = vmul.f32 %v246, %v261
    %v264 = vmul.f32 %v253, %v261
    %v265 = vmul.f32 %v260, %v261
    %v266 = vmul.f32 %v216, 6.2831855
    %v267 = vmul.f32 %v217, 6.2831855
    %v268 = vmul.f32 %v218, 6.2831855
    %v269 = vmul.f32 %v219, 6.2831855
    %v270 = vand.u32 2147483647, %v266
    %vm271 = vcmp.le.f32.partialorder %v270, 0.7853982
    %vm272 = vcmp.lt.s32.totalorder %v266, 0
    %v273 = vand.u32 %v266, 2139095040
    %v274 = vshrl.u32 %v273, 23
    %v275 = vsub.s32 %v274, 127
    %v276 = vand.u32 2147483647, %v266
    %v277 = vand.u32 %v276, 8388607
    %v278 = vor.u32 %v277, 8388608
    %v279 = vsub.s32 0, %v278
    %v280 = vadd.s32 %v275, 1
    %vm281 = vcmp.gt.s32.totalorder %v280, 0
    %v282 = vsel %vm281, %v280, 0
    %v283 = vshrl.u32 %v282, 5
    %v284 = vand.u32 %v282, 31
    %v285 = vsub.s32 32, %v284
    %v286 = vshrl.u32 683565275, %v285
    %v287 = vshll.u32 683565275, %v284
    %v288 = vshrl.u32 2475754826, %v285
    %v289 = vor.u32 %v287, %v288
    %v290 = vshll.u32 2475754826, %v284
    %v291 = vshrl.u32 2131351028, %v285
    %v292 = vor.u32 %v290, %v291
    %v293 = vshll.u32 2131351028, %v284
    %v294 = vshrl.u32 2102212464, %v285
    %v295 = vor.u32 %v293, %v294
    %v296 = vshll.u32 2102212464, %v284
    %v297 = vshrl.u32 920167782, %v285
    %v298 = vor.u32 %v296, %v297
    %v299 = vshll.u32 920167782, %v284
    %v300 = vshrl.u32 1326507024, %v285
    %v301 = vor.u32 %v299, %v300
    %vm302 = vcmp.lt.s32.totalorder %v283, 1
    %vm303 = vcmp.lt.s32.totalorder %v283, 2
    %vm304 = vcmp.lt.s32.totalorder %v283, 3
    %vm305 = vcmp.lt.s32.totalorder %v283, 4
    %v306 = vsel %vm302, %v286, %v289
    %v307 = vsel %vm305, %v295, 2102212464
    %v308 = vsel %vm304, %v292, %v307
    %v309 = vsel %vm303, %v306, %v308
    %v310 = vsel %vm302, %v289, %v292
    %v311 = vsel %vm305, %v298, 920167782
    %v312 = vsel %vm304, %v295, %v311
    %v313 = vsel %vm303, %v310, %v312
    %v314 = vsel %vm302, %v292, %v295
    %v315 = vsel %vm305, %v301, 1326507024
    %v316 = vsel %vm304, %v298, %v315
    %v317 = vsel %vm303, %v314, %v316
    %v318 = vshll.u32 %v278, 8
    %v319 = vmul.u32.u64.compose %v318, %v317
    %v320 = vextract.low.u32 %v319
    %v321 = vextract.high.u32 %v319
    %v322 = vmul.u32.u64.compose %v318, %v313
    %v323 = vextract.low.u32 %v322
    %v324 = vextract.high.u32 %v322
    %v325 = vmul.u32 %v318, %v309
    %v326 = vadd.s32 %v321, %v323
    %vm327 = vc.u32 %v321, %v323
    %v328 = vadd.s32 %v324, 1
    %v329 = vsel %vm327, %v328, %v324
    %v330 = vadd.s32 %v325, %v329
    %v331 = vadd.s32 %v330, 536870912
    %v332 = vshrl.u32 %v331, 30
    %v333 = vshll.u32 %v332, 30
    %v334 = vsub.s32 %v330, %v333
    %vm335 = vcmp.lt.s32.totalorder %v334, 0
    %v336 = vsub.s32 0, %v334
    %v337 = vsel %vm335, %v336, %v334
    %v338 = vclz %v337
    %v339 = vsub.s32 %v338, 2
    %vm340 = vcmp.gt.s32.totalorder 0, %v339
    %v341 = vsel %vm340, 0, %v339
    %v342 = vsub.s32 32, %v341
    %v343 = vshll.u32 %v334, %v341
    %v344 = vshrl.u32 %v326, %v342
    %v345 = vor.u32 %v343, %v344
    %v346 = vsub.s32 4294967266, %v341
    %v347 = vadd.s32 %v346, 127
    %v348 = vshll.u32 %v347, 23
    %v349 = vor.u32 4788187, %v348
    %v350 = vand.u32 2147483647, %v349
    %v352 = vcvt.s32.f32 %v345
    %v353 = vmul.f32 %v352, %v350
    %v354 = vxor.u32 %v353, 2147483648
    %v355 = vsel %vm272, %v354, %v353
    %v356 = vsub.s32 4, %v332
    %v357 = vsel %vm272, %v356, %v332
    %v358 = vsel %vm271, %v266, %v355
    %v359 = vsel %vm271, 0, %v357
    %v360 = vcosq.f32.pop %v358
    %v361 = vsinq.f32.pop %v358
    %vm362 = vweird.f32 %v266
    %v363 = vand.u32 %v359, 3
    %vm364 = vcmp.lt.s32.totalorder %v363, 2
    %vm365 = vcmp.eq.s32.totalorder %v363, 0
    %v366 = vxor.u32 %v361, 2147483648
    %v367 = vsel %vm365, %v360, %v366
    %vm368 = vcmp.eq.s32.totalorder %v363, 2
    %v369 = vxor.u32 %v360, 2147483648
    %v370 = vsel %vm368, %v369, %v361
    %v371 = vsel %vm364, %v367, %v370
    %v372 = vsel %vm362, nan, %v371
    %v373 = vand.u32 2147483647, %v267
    %vm374 = vcmp.le.f32.partialorder %v373, 0.7853982
    %vm375 = vcmp.lt.s32.totalorder %v267, 0
    %v376 = vand.u32 %v267, 2139095040
    %v377 = vshrl.u32 %v376, 23
    %v378 = vsub.s32 %v377, 127
    %v379 = vand.u32 2147483647, %v267
    %v380 = vand.u32 %v379, 8388607
    %v381 = vor.u32 %v380, 8388608
    %v382 = vsub.s32 0, %v381
    %v383 = vadd.s32 %v378, 1
    %vm384 = vcmp.gt.s32.totalorder %v383, 0
    %v385 = vsel %vm384, %v383, 0
    %v386 = vshrl.u32 %v385, 5
    %v387 = vand.u32 %v385, 31
    %v388 = vsub.s32 32, %v387
    %v389 = vshrl.u32 683565275, %v388
    %v390 = vshll.u32 683565275, %v387
    %v391 = vshrl.u32 2475754826, %v388
    %v392 = vor.u32 %v390, %v391
    %v393 = vshll.u32 2475754826, %v387
    %v394 = vshrl.u32 2131351028, %v388
    %v395 = vor.u32 %v393, %v394
    %v396 = vshll.u32 2131351028, %v387
    %v397 = vshrl.u32 2102212464, %v388
    %v398 = vor.u32 %v396, %v397
    %v399 = vshll.u32 2102212464, %v387
    %v400 = vshrl.u32 920167782, %v388
    %v401 = vor.u32 %v399, %v400
    %v402 = vshll.u32 920167782, %v387
    %v403 = vshrl.u32 1326507024, %v388
    %v404 = vor.u32 %v402, %v403
    %vm405 = vcmp.lt.s32.totalorder %v386, 1
    %vm406 = vcmp.lt.s32.totalorder %v386, 2
    %vm407 = vcmp.lt.s32.totalorder %v386, 3
    %vm408 = vcmp.lt.s32.totalorder %v386, 4
    %v409 = vsel %vm405, %v389, %v392
    %v410 = vsel %vm408, %v398, 2102212464
    %v411 = vsel %vm407, %v395, %v410
    %v412 = vsel %vm406, %v409, %v411
    %v413 = vsel %vm405, %v392, %v395
    %v414 = vsel %vm408, %v401, 920167782
    %v415 = vsel %vm407, %v398, %v414
    %v416 = vsel %vm406, %v413, %v415
    %v417 = vsel %vm405, %v395, %v398
    %v418 = vsel %vm408, %v404, 1326507024
    %v419 = vsel %vm407, %v401, %v418
    %v420 = vsel %vm406, %v417, %v419
    %v421 = vshll.u32 %v381, 8
    %v422 = vmul.u32.u64.compose %v421, %v420
    %v423 = vextract.low.u32 %v422
    %v424 = vextract.high.u32 %v422
    %v425 = vmul.u32.u64.compose %v421, %v416
    %v426 = vextract.low.u32 %v425
    %v427 = vextract.high.u32 %v425
    %v428 = vmul.u32 %v421, %v412
    %v429 = vadd.s32 %v424, %v426
    %vm430 = vc.u32 %v424, %v426
    %v431 = vadd.s32 %v427, 1
    %v432 = vsel %vm430, %v431, %v427
    %v433 = vadd.s32 %v428, %v432
    %v434 = vadd.s32 %v433, 536870912
    %v435 = vshrl.u32 %v434, 30
    %v436 = vshll.u32 %v435, 30
    %v437 = vsub.s32 %v433, %v436
    %vm438 = vcmp.lt.s32.totalorder %v437, 0
    %v439 = vsub.s32 0, %v437
    %v440 = vsel %vm438, %v439, %v437
    %v441 = vclz %v440
    %v442 = vsub.s32 %v441, 2
    %vm443 = vcmp.gt.s32.totalorder 0, %v442
    %v444 = vsel %vm443, 0, %v442
    %v445 = vsub.s32 32, %v444
    %v446 = vshll.u32 %v437, %v444
    %v447 = vshrl.u32 %v429, %v445
    %v448 = vor.u32 %v446, %v447
    %v449 = vsub.s32 4294967266, %v444
    %v450 = vadd.s32 %v449, 127
    %v451 = vshll.u32 %v450, 23
    %v452 = vor.u32 4788187, %v451
    %v453 = vand.u32 2147483647, %v452
    %v455 = vcvt.s32.f32 %v448
    %v456 = vmul.f32 %v455, %v453
    %v457 = vxor.u32 %v456, 2147483648
    %v458 = vsel %vm375, %v457, %v456
    %v459 = vsub.s32 4, %v435
    %v460 = vsel %vm375, %v459, %v435
    %v461 = vsel %vm374, %v267, %v458
    %v462 = vsel %vm374, 0, %v460
    %v463 = vcosq.f32.pop %v461
    %v464 = vsinq.f32.pop %v461
    %vm465 = vweird.f32 %v267
    %v466 = vand.u32 %v462, 3
    %vm467 = vcmp.lt.s32.totalorder %v466, 2
    %vm468 = vcmp.eq.s32.totalorder %v466, 0
    %v469 = vxor.u32 %v464, 2147483648
    %v470 = vsel %vm468, %v463, %v469
    %vm471 = vcmp.eq.s32.totalorder %v466, 2
    %v472 = vxor.u32 %v463, 2147483648
    %v473 = vsel %vm471, %v472, %v464
    %v474 = vsel %vm467, %v470, %v473
    %v475 = vsel %vm465, nan, %v474
    %v476 = vand.u32 2147483647, %v268
    %vm477 = vcmp.le.f32.partialorder %v476, 0.7853982
    %vm478 = vcmp.lt.s32.totalorder %v268, 0
    %v479 = vand.u32 %v268, 2139095040
    %v480 = vshrl.u32 %v479, 23
    %v481 = vsub.s32 %v480, 127
    %v482 = vand.u32 2147483647, %v268
    %v483 = vand.u32 %v482, 8388607
    %v484 = vor.u32 %v483, 8388608
    %v485 = vsub.s32 0, %v484
    %v486 = vadd.s32 %v481, 1
    %vm487 = vcmp.gt.s32.totalorder %v486, 0
    %v488 = vsel %vm487, %v486, 0
    %v489 = vshrl.u32 %v488, 5
    %v490 = vand.u32 %v488, 31
    %v491 = vsub.s32 32, %v490
    %v492 = vshrl.u32 683565275, %v491
    %v493 = vshll.u32 683565275, %v490
    %v494 = vshrl.u32 2475754826, %v491
    %v495 = vor.u32 %v493, %v494
    %v496 = vshll.u32 2475754826, %v490
    %v497 = vshrl.u32 2131351028, %v491
    %v498 = vor.u32 %v496, %v497
    %v499 = vshll.u32 2131351028, %v490
    %v500 = vshrl.u32 2102212464, %v491
    %v501 = vor.u32 %v499, %v500
    %v502 = vshll.u32 2102212464, %v490
    %v503 = vshrl.u32 920167782, %v491
    %v504 = vor.u32 %v502, %v503
    %v505 = vshll.u32 920167782, %v490
    %v506 = vshrl.u32 1326507024, %v491
    %v507 = vor.u32 %v505, %v506
    %vm508 = vcmp.lt.s32.totalorder %v489, 1
    %vm509 = vcmp.lt.s32.totalorder %v489, 2
    %vm510 = vcmp.lt.s32.totalorder %v489, 3
    %vm511 = vcmp.lt.s32.totalorder %v489, 4
    %v512 = vsel %vm508, %v492, %v495
    %v513 = vsel %vm511, %v501, 2102212464
    %v514 = vsel %vm510, %v498, %v513
    %v515 = vsel %vm509, %v512, %v514
    %v516 = vsel %vm508, %v495, %v498
    %v517 = vsel %vm511, %v504, 920167782
    %v518 = vsel %vm510, %v501, %v517
    %v519 = vsel %vm509, %v516, %v518
    %v520 = vsel %vm508, %v498, %v501
    %v521 = vsel %vm511, %v507, 1326507024
    %v522 = vsel %vm510, %v504, %v521
    %v523 = vsel %vm509, %v520, %v522
    %v524 = vshll.u32 %v484, 8
    %v525 = vmul.u32.u64.compose %v524, %v523
    %v526 = vextract.low.u32 %v525
    %v527 = vextract.high.u32 %v525
    %v528 = vmul.u32.u64.compose %v524, %v519
    %v529 = vextract.low.u32 %v528
    %v530 = vextract.high.u32 %v528
    %v531 = vmul.u32 %v524, %v515
    %v532 = vadd.s32 %v527, %v529
    %vm533 = vc.u32 %v527, %v529
    %v534 = vadd.s32 %v530, 1
    %v535 = vsel %vm533, %v534, %v530
    %v536 = vadd.s32 %v531, %v535
    %v537 = vadd.s32 %v536, 536870912
    %v538 = vshrl.u32 %v537, 30
    %v539 = vshll.u32 %v538, 30
    %v540 = vsub.s32 %v536, %v539
    %vm541 = vcmp.lt.s32.totalorder %v540, 0
    %v542 = vsub.s32 0, %v540
    %v543 = vsel %vm541, %v542, %v540
    %v544 = vclz %v543
    %v545 = vsub.s32 %v544, 2
    %vm546 = vcmp.gt.s32.totalorder 0, %v545
    %v547 = vsel %vm546, 0, %v545
    %v548 = vsub.s32 32, %v547
    %v549 = vshll.u32 %v540, %v547
    %v550 = vshrl.u32 %v532, %v548
    %v551 = vor.u32 %v549, %v550
    %v552 = vsub.s32 4294967266, %v547
    %v553 = vadd.s32 %v552, 127
    %v554 = vshll.u32 %v553, 23
    %v555 = vor.u32 4788187, %v554
    %v556 = vand.u32 2147483647, %v555
    %v558 = vcvt.s32.f32 %v551
    %v559 = vmul.f32 %v558, %v556
    %v560 = vxor.u32 %v559, 2147483648
    %v561 = vsel %vm478, %v560, %v559
    %v562 = vsub.s32 4, %v538
    %v563 = vsel %vm478, %v562, %v538
    %v564 = vsel %vm477, %v268, %v561
    %v565 = vsel %vm477, 0, %v563
    %v566 = vcosq.f32.pop %v564
    %v567 = vsinq.f32.pop %v564
    %vm568 = vweird.f32 %v268
    %v569 = vand.u32 %v565, 3
    %vm570 = vcmp.lt.s32.totalorder %v569, 2
    %vm571 = vcmp.eq.s32.totalorder %v569, 0
    %v572 = vxor.u32 %v567, 2147483648
    %v573 = vsel %vm571, %v566, %v572
    %vm574 = vcmp.eq.s32.totalorder %v569, 2
    %v575 = vxor.u32 %v566, 2147483648
    %v576 = vsel %vm574, %v575, %v567
    %v577 = vsel %vm570, %v573, %v576
    %v578 = vsel %vm568, nan, %v577
    %v579 = vand.u32 2147483647, %v269
    %vm580 = vcmp.le.f32.partialorder %v579, 0.7853982
    %vm581 = vcmp.lt.s32.totalorder %v269, 0
    %v582 = vand.u32 %v269, 2139095040
    %v583 = vshrl.u32 %v582, 23
    %v584 = vsub.s32 %v583, 127
    %v585 = vand.u32 2147483647, %v269
    %v586 = vand.u32 %v585, 8388607
    %v587 = vor.u32 %v586, 8388608
    %v588 = vsub.s32 0, %v587
    %v589 = vadd.s32 %v584, 1
    %vm590 = vcmp.gt.s32.totalorder %v589, 0
    %v591 = vsel %vm590, %v589, 0
    %v592 = vshrl.u32 %v591, 5
    %v593 = vand.u32 %v591, 31
    %v594 = vsub.s32 32, %v593
    %v595 = vshrl.u32 683565275, %v594
    %v596 = vshll.u32 683565275, %v593
    %v597 = vshrl.u32 2475754826, %v594
    %v598 = vor.u32 %v596, %v597
    %v599 = vshll.u32 2475754826, %v593
    %v600 = vshrl.u32 2131351028, %v594
    %v601 = vor.u32 %v599, %v600
    %v602 = vshll.u32 2131351028, %v593
    %v603 = vshrl.u32 2102212464, %v594
    %v604 = vor.u32 %v602, %v603
    %v605 = vshll.u32 2102212464, %v593
    %v606 = vshrl.u32 920167782, %v594
    %v607 = vor.u32 %v605, %v606
    %v608 = vshll.u32 920167782, %v593
    %v609 = vshrl.u32 1326507024, %v594
    %v610 = vor.u32 %v608, %v609
    %vm611 = vcmp.lt.s32.totalorder %v592, 1
    %vm612 = vcmp.lt.s32.totalorder %v592, 2
    %vm613 = vcmp.lt.s32.totalorder %v592, 3
    %vm614 = vcmp.lt.s32.totalorder %v592, 4
    %v615 = vsel %vm611, %v595, %v598
    %v616 = vsel %vm614, %v604, 2102212464
    %v617 = vsel %vm613, %v601, %v616
    %v618 = vsel %vm612, %v615, %v617
    %v619 = vsel %vm611, %v598, %v601
    %v620 = vsel %vm614, %v607, 920167782
    %v621 = vsel %vm613, %v604, %v620
    %v622 = vsel %vm612, %v619, %v621
    %v623 = vsel %vm611, %v601, %v604
    %v624 = vsel %vm614, %v610, 1326507024
    %v625 = vsel %vm613, %v607, %v624
    %v626 = vsel %vm612, %v623, %v625
    %v627 = vshll.u32 %v587, 8
    %v628 = vmul.u32.u64.compose %v627, %v626
    %v629 = vextract.low.u32 %v628
    %v630 = vextract.high.u32 %v628
    %v631 = vmul.u32.u64.compose %v627, %v622
    %v632 = vextract.low.u32 %v631
    %v633 = vextract.high.u32 %v631
    %v634 = vmul.u32 %v627, %v618
    %v635 = vadd.s32 %v630, %v632
    %vm636 = vc.u32 %v630, %v632
    %v637 = vadd.s32 %v633, 1
    %v638 = vsel %vm636, %v637, %v633
    %v639 = vadd.s32 %v634, %v638
    %v640 = vadd.s32 %v639, 536870912
    %v641 = vshrl.u32 %v640, 30
    %v642 = vshll.u32 %v641, 30
    %v643 = vsub.s32 %v639, %v642
    %vm644 = vcmp.lt.s32.totalorder %v643, 0
    %v645 = vsub.s32 0, %v643
    %v646 = vsel %vm644, %v645, %v643
    %v647 = vclz %v646
    %v648 = vsub.s32 %v647, 2
    %vm649 = vcmp.gt.s32.totalorder 0, %v648
    %v650 = vsel %vm649, 0, %v648
    %v651 = vsub.s32 32, %v650
    %v652 = vshll.u32 %v643, %v650
    %v653 = vshrl.u32 %v635, %v651
    %v654 = vor.u32 %v652, %v653
    %v655 = vsub.s32 4294967266, %v650
    %v656 = vadd.s32 %v655, 127
    %v657 = vshll.u32 %v656, 23
    %v658 = vor.u32 4788187, %v657
    %v659 = vand.u32 2147483647, %v658
    %v661 = vcvt.s32.f32 %v654
    %v662 = vmul.f32 %v661, %v659
    %v663 = vxor.u32 %v662, 2147483648
    %v664 = vsel %vm581, %v663, %v662
    %v665 = vsub.s32 4, %v641
    %v666 = vsel %vm581, %v665, %v641
    %v667 = vsel %vm580, %v269, %v664
    %v668 = vsel %vm580, 0, %v666
    %v669 = vcosq.f32.pop %v667
    %v670 = vsinq.f32.pop %v667
    %vm671 = vweird.f32 %v269
    %v672 = vand.u32 %v668, 3
    %vm673 = vcmp.lt.s32.totalorder %v672, 2
    %vm674 = vcmp.eq.s32.totalorder %v672, 0
    %v675 = vxor.u32 %v670, 2147483648
    %v676 = vsel %vm674, %v669, %v675
    %vm677 = vcmp.eq.s32.totalorder %v672, 2
    %v678 = vxor.u32 %v669, 2147483648
    %v679 = vsel %vm677, %v678, %v670
    %v680 = vsel %vm673, %v676, %v679
    %v681 = vsel %vm671, nan, %v680
    %v682 = vmul.f32 %v262, %v372
    %v683 = vmul.f32 %v263, %v475
    %v684 = vmul.f32 %v264, %v578
    %v685 = vmul.f32 %v265, %v681
    %v686 = vand.u32 2147483647, %v266
    %vm687 = vcmp.le.f32.partialorder %v686, 0.7853982
    %vm688 = vcmp.lt.s32.totalorder %v266, 0
    %v689 = vand.u32 %v266, 2139095040
    %v690 = vshrl.u32 %v689, 23
    %v691 = vsub.s32 %v690, 127
    %v692 = vand.u32 2147483647, %v266
    %v693 = vand.u32 %v692, 8388607
    %v694 = vor.u32 %v693, 8388608
    %v695 = vsub.s32 0, %v694
    %v696 = vadd.s32 %v691, 1
    %vm697 = vcmp.gt.s32.totalorder %v696, 0
    %v698 = vsel %vm697, %v696, 0
    %v699 = vshrl.u32 %v698, 5
    %v700 = vand.u32 %v698, 31
    %v701 = vsub.s32 32, %v700
    %v702 = vshrl.u32 683565275, %v701
    %v703 = vshll.u32 683565275, %v700
    %v704 = vshrl.u32 2475754826, %v701
    %v705 = vor.u32 %v703, %v704
    %v706 = vshll.u32 2475754826, %v700
    %v707 = vshrl.u32 2131351028, %v701
    %v708 = vor.u32 %v706, %v707
    %v709 = vshll.u32 2131351028, %v700
    %v710 = vshrl.u32 2102212464, %v701
    %v711 = vor.u32 %v709, %v710
    %v712 = vshll.u32 2102212464, %v700
    %v713 = vshrl.u32 920167782, %v701
    %v714 = vor.u32 %v712, %v713
    %v715 = vshll.u32 920167782, %v700
    %v716 = vshrl.u32 1326507024, %v701
    %v717 = vor.u32 %v715, %v716
    %vm718 = vcmp.lt.s32.totalorder %v699, 1
    %vm719 = vcmp.lt.s32.totalorder %v699, 2
    %vm720 = vcmp.lt.s32.totalorder %v699, 3
    %vm721 = vcmp.lt.s32.totalorder %v699, 4
    %v722 = vsel %vm718, %v702, %v705
    %v723 = vsel %vm721, %v711, 2102212464
    %v724 = vsel %vm720, %v708, %v723
    %v725 = vsel %vm719, %v722, %v724
    %v726 = vsel %vm718, %v705, %v708
    %v727 = vsel %vm721, %v714, 920167782
    %v728 = vsel %vm720, %v711, %v727
    %v729 = vsel %vm719, %v726, %v728
    %v730 = vsel %vm718, %v708, %v711
    %v731 = vsel %vm721, %v717, 1326507024
    %v732 = vsel %vm720, %v714, %v731
    %v733 = vsel %vm719, %v730, %v732
    %v734 = vshll.u32 %v694, 8
    %v735 = vmul.u32.u64.compose %v734, %v733
    %v736 = vextract.low.u32 %v735
    %v737 = vextract.high.u32 %v735
    %v738 = vmul.u32.u64.compose %v734, %v729
    %v739 = vextract.low.u32 %v738
    %v740 = vextract.high.u32 %v738
    %v741 = vmul.u32 %v734, %v725
    %v742 = vadd.s32 %v737, %v739
    %vm743 = vc.u32 %v737, %v739
    %v744 = vadd.s32 %v740, 1
    %v745 = vsel %vm743, %v744, %v740
    %v746 = vadd.s32 %v741, %v745
    %v747 = vadd.s32 %v746, 536870912
    %v748 = vshrl.u32 %v747, 30
    %v749 = vshll.u32 %v748, 30
    %v750 = vsub.s32 %v746, %v749
    %vm751 = vcmp.lt.s32.totalorder %v750, 0
    %v752 = vsub.s32 0, %v750
    %v753 = vsel %vm751, %v752, %v750
    %v754 = vclz %v753
    %v755 = vsub.s32 %v754, 2
    %vm756 = vcmp.gt.s32.totalorder 0, %v755
    %v757 = vsel %vm756, 0, %v755
    %v758 = vsub.s32 32, %v757
    %v759 = vshll.u32 %v750, %v757
    %v760 = vshrl.u32 %v742, %v758
    %v761 = vor.u32 %v759, %v760
    %v762 = vsub.s32 4294967266, %v757
    %v763 = vadd.s32 %v762, 127
    %v764 = vshll.u32 %v763, 23
    %v765 = vor.u32 4788187, %v764
    %v766 = vand.u32 2147483647, %v765
    %v768 = vcvt.s32.f32 %v761
    %v769 = vmul.f32 %v768, %v766
    %v770 = vxor.u32 %v769, 2147483648
    %v771 = vsel %vm688, %v770, %v769
    %v772 = vsub.s32 4, %v748
    %v773 = vsel %vm688, %v772, %v748
    %v774 = vsel %vm687, %v266, %v771
    %v775 = vsel %vm687, 0, %v773
    %v776 = vcosq.f32.pop %v774
    %v777 = vsinq.f32.pop %v774
    %vm778 = vweird.f32 %v266
    %v779 = vadd.s32 %v775, 3
    %v780 = vand.u32 %v779, 3
    %vm781 = vcmp.lt.s32.totalorder %v780, 2
    %vm782 = vcmp.eq.s32.totalorder %v780, 0
    %v783 = vxor.u32 %v777, 2147483648
    %v784 = vsel %vm782, %v776, %v783
    %vm785 = vcmp.eq.s32.totalorder %v780, 2
    %v786 = vxor.u32 %v776, 2147483648
    %v787 = vsel %vm785, %v786, %v777
    %v788 = vsel %vm781, %v784, %v787
    %v789 = vsel %vm778, nan, %v788
    %v790 = vand.u32 2147483647, %v267
    %vm791 = vcmp.le.f32.partialorder %v790, 0.7853982
    %vm792 = vcmp.lt.s32.totalorder %v267, 0
    %v793 = vand.u32 %v267, 2139095040
    %v794 = vshrl.u32 %v793, 23
    %v795 = vsub.s32 %v794, 127
    %v796 = vand.u32 2147483647, %v267
    %v797 = vand.u32 %v796, 8388607
    %v798 = vor.u32 %v797, 8388608
    %v799 = vsub.s32 0, %v798
    %v800 = vadd.s32 %v795, 1
    %vm801 = vcmp.gt.s32.totalorder %v800, 0
    %v802 = vsel %vm801, %v800, 0
    %v803 = vshrl.u32 %v802, 5
    %v804 = vand.u32 %v802, 31
    %v805 = vsub.s32 32, %v804
    %v806 = vshrl.u32 683565275, %v805
    %v807 = vshll.u32 683565275, %v804
    %v808 = vshrl.u32 2475754826, %v805
    %v809 = vor.u32 %v807, %v808
    %v810 = vshll.u32 2475754826, %v804
    %v811 = vshrl.u32 2131351028, %v805
    %v812 = vor.u32 %v810, %v811
    %v813 = vshll.u32 2131351028, %v804
    %v814 = vshrl.u32 2102212464, %v805
    %v815 = vor.u32 %v813, %v814
    %v816 = vshll.u32 2102212464, %v804
    %v817 = vshrl.u32 920167782, %v805
    %v818 = vor.u32 %v816, %v817
    %v819 = vshll.u32 920167782, %v804
    %v820 = vshrl.u32 1326507024, %v805
    %v821 = vor.u32 %v819, %v820
    %vm822 = vcmp.lt.s32.totalorder %v803, 1
    %vm823 = vcmp.lt.s32.totalorder %v803, 2
    %vm824 = vcmp.lt.s32.totalorder %v803, 3
    %vm825 = vcmp.lt.s32.totalorder %v803, 4
    %v826 = vsel %vm822, %v806, %v809
    %v827 = vsel %vm825, %v815, 2102212464
    %v828 = vsel %vm824, %v812, %v827
    %v829 = vsel %vm823, %v826, %v828
    %v830 = vsel %vm822, %v809, %v812
    %v831 = vsel %vm825, %v818, 920167782
    %v832 = vsel %vm824, %v815, %v831
    %v833 = vsel %vm823, %v830, %v832
    %v834 = vsel %vm822, %v812, %v815
    %v835 = vsel %vm825, %v821, 1326507024
    %v836 = vsel %vm824, %v818, %v835
    %v837 = vsel %vm823, %v834, %v836
    %v838 = vshll.u32 %v798, 8
    %v839 = vmul.u32.u64.compose %v838, %v837
    %v840 = vextract.low.u32 %v839
    %v841 = vextract.high.u32 %v839
    %v842 = vmul.u32.u64.compose %v838, %v833
    %v843 = vextract.low.u32 %v842
    %v844 = vextract.high.u32 %v842
    %v845 = vmul.u32 %v838, %v829
    %v846 = vadd.s32 %v841, %v843
    %vm847 = vc.u32 %v841, %v843
    %v848 = vadd.s32 %v844, 1
    %v849 = vsel %vm847, %v848, %v844
    %v850 = vadd.s32 %v845, %v849
    %v851 = vadd.s32 %v850, 536870912
    %v852 = vshrl.u32 %v851, 30
    %v853 = vshll.u32 %v852, 30
    %v854 = vsub.s32 %v850, %v853
    %vm855 = vcmp.lt.s32.totalorder %v854, 0
    %v856 = vsub.s32 0, %v854
    %v857 = vsel %vm855, %v856, %v854
    %v858 = vclz %v857
    %v859 = vsub.s32 %v858, 2
    %vm860 = vcmp.gt.s32.totalorder 0, %v859
    %v861 = vsel %vm860, 0, %v859
    %v862 = vsub.s32 32, %v861
    %v863 = vshll.u32 %v854, %v861
    %v864 = vshrl.u32 %v846, %v862
    %v865 = vor.u32 %v863, %v864
    %v866 = vsub.s32 4294967266, %v861
    %v867 = vadd.s32 %v866, 127
    %v868 = vshll.u32 %v867, 23
    %v869 = vor.u32 4788187, %v868
    %v870 = vand.u32 2147483647, %v869
    %v872 = vcvt.s32.f32 %v865
    %v873 = vmul.f32 %v872, %v870
    %v874 = vxor.u32 %v873, 2147483648
    %v875 = vsel %vm792, %v874, %v873
    %v876 = vsub.s32 4, %v852
    %v877 = vsel %vm792, %v876, %v852
    %v878 = vsel %vm791, %v267, %v875
    %v879 = vsel %vm791, 0, %v877
    %v880 = vcosq.f32.pop %v878
    %v881 = vsinq.f32.pop %v878
    %vm882 = vweird.f32 %v267
    %v883 = vadd.s32 %v879, 3
    %v884 = vand.u32 %v883, 3
    %vm885 = vcmp.lt.s32.totalorder %v884, 2
    %vm886 = vcmp.eq.s32.totalorder %v884, 0
    %v887 = vxor.u32 %v881, 2147483648
    %v888 = vsel %vm886, %v880, %v887
    %vm889 = vcmp.eq.s32.totalorder %v884, 2
    %v890 = vxor.u32 %v880, 2147483648
    %v891 = vsel %vm889, %v890, %v881
    %v892 = vsel %vm885, %v888, %v891
    %v893 = vsel %vm882, nan, %v892
    %v894 = vand.u32 2147483647, %v268
    %vm895 = vcmp.le.f32.partialorder %v894, 0.7853982
    %vm896 = vcmp.lt.s32.totalorder %v268, 0
    %v897 = vand.u32 %v268, 2139095040
    %v898 = vshrl.u32 %v897, 23
    %v899 = vsub.s32 %v898, 127
    %v900 = vand.u32 2147483647, %v268
    %v901 = vand.u32 %v900, 8388607
    %v902 = vor.u32 %v901, 8388608
    %v903 = vsub.s32 0, %v902
    %v904 = vadd.s32 %v899, 1
    %vm905 = vcmp.gt.s32.totalorder %v904, 0
    %v906 = vsel %vm905, %v904, 0
    %v907 = vshrl.u32 %v906, 5
    %v908 = vand.u32 %v906, 31
    %v909 = vsub.s32 32, %v908
    %v910 = vshrl.u32 683565275, %v909
    %v911 = vshll.u32 683565275, %v908
    %v912 = vshrl.u32 2475754826, %v909
    %v913 = vor.u32 %v911, %v912
    %v914 = vshll.u32 2475754826, %v908
    %v915 = vshrl.u32 2131351028, %v909
    %v916 = vor.u32 %v914, %v915
    %v917 = vshll.u32 2131351028, %v908
    %v918 = vshrl.u32 2102212464, %v909
    %v919 = vor.u32 %v917, %v918
    %v920 = vshll.u32 2102212464, %v908
    %v921 = vshrl.u32 920167782, %v909
    %v922 = vor.u32 %v920, %v921
    %v923 = vshll.u32 920167782, %v908
    %v924 = vshrl.u32 1326507024, %v909
    %v925 = vor.u32 %v923, %v924
    %vm926 = vcmp.lt.s32.totalorder %v907, 1
    %vm927 = vcmp.lt.s32.totalorder %v907, 2
    %vm928 = vcmp.lt.s32.totalorder %v907, 3
    %vm929 = vcmp.lt.s32.totalorder %v907, 4
    %v930 = vsel %vm926, %v910, %v913
    %v931 = vsel %vm929, %v919, 2102212464
    %v932 = vsel %vm928, %v916, %v931
    %v933 = vsel %vm927, %v930, %v932
    %v934 = vsel %vm926, %v913, %v916
    %v935 = vsel %vm929, %v922, 920167782
    %v936 = vsel %vm928, %v919, %v935
    %v937 = vsel %vm927, %v934, %v936
    %v938 = vsel %vm926, %v916, %v919
    %v939 = vsel %vm929, %v925, 1326507024
    %v940 = vsel %vm928, %v922, %v939
    %v941 = vsel %vm927, %v938, %v940
    %v942 = vshll.u32 %v902, 8
    %v943 = vmul.u32.u64.compose %v942, %v941
    %v944 = vextract.low.u32 %v943
    %v945 = vextract.high.u32 %v943
    %v946 = vmul.u32.u64.compose %v942, %v937
    %v947 = vextract.low.u32 %v946
    %v948 = vextract.high.u32 %v946
    %v949 = vmul.u32 %v942, %v933
    %v950 = vadd.s32 %v945, %v947
    %vm951 = vc.u32 %v945, %v947
    %v952 = vadd.s32 %v948, 1
    %v953 = vsel %vm951, %v952, %v948
    %v954 = vadd.s32 %v949, %v953
    %v955 = vadd.s32 %v954, 536870912
    %v956 = vshrl.u32 %v955, 30
    %v957 = vshll.u32 %v956, 30
    %v958 = vsub.s32 %v954, %v957
    %vm959 = vcmp.lt.s32.totalorder %v958, 0
    %v960 = vsub.s32 0, %v958
    %v961 = vsel %vm959, %v960, %v958
    %v962 = vclz %v961
    %v963 = vsub.s32 %v962, 2
    %vm964 = vcmp.gt.s32.totalorder 0, %v963
    %v965 = vsel %vm964, 0, %v963
    %v966 = vsub.s32 32, %v965
    %v967 = vshll.u32 %v958, %v965
    %v968 = vshrl.u32 %v950, %v966
    %v969 = vor.u32 %v967, %v968
    %v970 = vsub.s32 4294967266, %v965
    %v971 = vadd.s32 %v970, 127
    %v972 = vshll.u32 %v971, 23
    %v973 = vor.u32 4788187, %v972
    %v974 = vand.u32 2147483647, %v973
    %v976 = vcvt.s32.f32 %v969
    %v977 = vmul.f32 %v976, %v974
    %v978 = vxor.u32 %v977, 2147483648
    %v979 = vsel %vm896, %v978, %v977
    %v980 = vsub.s32 4, %v956
    %v981 = vsel %vm896, %v980, %v956
    %v982 = vsel %vm895, %v268, %v979
    %v983 = vsel %vm895, 0, %v981
    %v984 = vcosq.f32.pop %v982
    %v985 = vsinq.f32.pop %v982
    %vm986 = vweird.f32 %v268
    %v987 = vadd.s32 %v983, 3
    %v988 = vand.u32 %v987, 3
    %vm989 = vcmp.lt.s32.totalorder %v988, 2
    %vm990 = vcmp.eq.s32.totalorder %v988, 0
    %v991 = vxor.u32 %v985, 2147483648
    %v992 = vsel %vm990, %v984, %v991
    %vm993 = vcmp.eq.s32.totalorder %v988, 2
    %v994 = vxor.u32 %v984, 2147483648
    %v995 = vsel %vm993, %v994, %v985
    %v996 = vsel %vm989, %v992, %v995
    %v997 = vsel %vm986, nan, %v996
    %v998 = vand.u32 2147483647, %v269
    %vm999 = vcmp.le.f32.partialorder %v998, 0.7853982
    %vm1000 = vcmp.lt.s32.totalorder %v269, 0
    %v1001 = vand.u32 %v269, 2139095040
    %v1002 = vshrl.u32 %v1001, 23
    %v1003 = vsub.s32 %v1002, 127
    %v1004 = vand.u32 2147483647, %v269
    %v1005 = vand.u32 %v1004, 8388607
    %v1006 = vor.u32 %v1005, 8388608
    %v1007 = vsub.s32 0, %v1006
    %v1008 = vadd.s32 %v1003, 1
    %vm1009 = vcmp.gt.s32.totalorder %v1008, 0
    %v1010 = vsel %vm1009, %v1008, 0
    %v1011 = vshrl.u32 %v1010, 5
    %v1012 = vand.u32 %v1010, 31
    %v1013 = vsub.s32 32, %v1012
    %v1014 = vshrl.u32 683565275, %v1013
    %v1015 = vshll.u32 683565275, %v1012
    %v1016 = vshrl.u32 2475754826, %v1013
    %v1017 = vor.u32 %v1015, %v1016
    %v1018 = vshll.u32 2475754826, %v1012
    %v1019 = vshrl.u32 2131351028, %v1013
    %v1020 = vor.u32 %v1018, %v1019
    %v1021 = vshll.u32 2131351028, %v1012
    %v1022 = vshrl.u32 2102212464, %v1013
    %v1023 = vor.u32 %v1021, %v1022
    %v1024 = vshll.u32 2102212464, %v1012
    %v1025 = vshrl.u32 920167782, %v1013
    %v1026 = vor.u32 %v1024, %v1025
    %v1027 = vshll.u32 920167782, %v1012
    %v1028 = vshrl.u32 1326507024, %v1013
    %v1029 = vor.u32 %v1027, %v1028
    %vm1030 = vcmp.lt.s32.totalorder %v1011, 1
    %vm1031 = vcmp.lt.s32.totalorder %v1011, 2
    %vm1032 = vcmp.lt.s32.totalorder %v1011, 3
    %vm1033 = vcmp.lt.s32.totalorder %v1011, 4
    %v1034 = vsel %vm1030, %v1014, %v1017
    %v1035 = vsel %vm1033, %v1023, 2102212464
    %v1036 = vsel %vm1032, %v1020, %v1035
    %v1037 = vsel %vm1031, %v1034, %v1036
    %v1038 = vsel %vm1030, %v1017, %v1020
    %v1039 = vsel %vm1033, %v1026, 920167782
    %v1040 = vsel %vm1032, %v1023, %v1039
    %v1041 = vsel %vm1031, %v1038, %v1040
    %v1042 = vsel %vm1030, %v1020, %v1023
    %v1043 = vsel %vm1033, %v1029, 1326507024
    %v1044 = vsel %vm1032, %v1026, %v1043
    %v1045 = vsel %vm1031, %v1042, %v1044
    %v1046 = vshll.u32 %v1006, 8
    %v1047 = vmul.u32.u64.compose %v1046, %v1045
    %v1048 = vextract.low.u32 %v1047
    %v1049 = vextract.high.u32 %v1047
    %v1050 = vmul.u32.u64.compose %v1046, %v1041
    %v1051 = vextract.low.u32 %v1050
    %v1052 = vextract.high.u32 %v1050
    %v1053 = vmul.u32 %v1046, %v1037
    %v1054 = vadd.s32 %v1049, %v1051
    %vm1055 = vc.u32 %v1049, %v1051
    %v1056 = vadd.s32 %v1052, 1
    %v1057 = vsel %vm1055, %v1056, %v1052
    %v1058 = vadd.s32 %v1053, %v1057
    %v1059 = vadd.s32 %v1058, 536870912
    %v1060 = vshrl.u32 %v1059, 30
    %v1061 = vshll.u32 %v1060, 30
    %v1062 = vsub.s32 %v1058, %v1061
    %vm1063 = vcmp.lt.s32.totalorder %v1062, 0
    %v1064 = vsub.s32 0, %v1062
    %v1065 = vsel %vm1063, %v1064, %v1062
    %v1066 = vclz %v1065
    %v1067 = vsub.s32 %v1066, 2
    %vm1068 = vcmp.gt.s32.totalorder 0, %v1067
    %v1069 = vsel %vm1068, 0, %v1067
    %v1070 = vsub.s32 32, %v1069
    %v1071 = vshll.u32 %v1062, %v1069
    %v1072 = vshrl.u32 %v1054, %v1070
    %v1073 = vor.u32 %v1071, %v1072
    %v1074 = vsub.s32 4294967266, %v1069
    %v1075 = vadd.s32 %v1074, 127
    %v1076 = vshll.u32 %v1075, 23
    %v1077 = vor.u32 4788187, %v1076
    %v1078 = vand.u32 2147483647, %v1077
    %v1080 = vcvt.s32.f32 %v1073
    %v1081 = vmul.f32 %v1080, %v1078
    %v1082 = vxor.u32 %v1081, 2147483648
    %v1083 = vsel %vm1000, %v1082, %v1081
    %v1084 = vsub.s32 4, %v1060
    %v1085 = vsel %vm1000, %v1084, %v1060
    %v1086 = vsel %vm999, %v269, %v1083
    %v1087 = vsel %vm999, 0, %v1085
    %v1088 = vcosq.f32.pop %v1086
    %v1089 = vsinq.f32.pop %v1086
    %vm1090 = vweird.f32 %v269
    %v1091 = vadd.s32 %v1087, 3
    %v1092 = vand.u32 %v1091, 3
    %vm1093 = vcmp.lt.s32.totalorder %v1092, 2
    %vm1094 = vcmp.eq.s32.totalorder %v1092, 0
    %v1095 = vxor.u32 %v1089, 2147483648
    %v1096 = vsel %vm1094, %v1088, %v1095
    %vm1097 = vcmp.eq.s32.totalorder %v1092, 2
    %v1098 = vxor.u32 %v1088, 2147483648
    %v1099 = vsel %vm1097, %v1098, %v1089
    %v1100 = vsel %vm1093, %v1096, %v1099
    %v1101 = vsel %vm1090, nan, %v1100
    %v1102 = vmul.f32 %v262, %v789
    %v1103 = vmul.f32 %v263, %v893
    %v1104 = vmul.f32 %v264, %v997
    %v1105 = vmul.f32 %v265, %v1101
    %v1106 = vld [vmem:[#allocation4] sm:$0xff]
    %v1107 = vld [vmem:[#allocation4 + $0x8] sm:$0xff]
    %v1108 = vld [vmem:[#allocation4 + $0x10] sm:$0xff]
    %v1109 = vld [vmem:[#allocation4 + $0x18] sm:$0xff]
    %v1110 = vmul.f32 %v1106, %v682
    %v1111 = vmul.f32 %v1107, %v683
    %v1112 = vmul.f32 %v1108, %v684
    %v1113 = vmul.f32 %v1109, %v685
    %1114 = vst [vmem:[#allocation7] sm:$0xff] %v1110
    %1115 = vst [vmem:[#allocation7 + $0x8] sm:$0xff] %v1111
    %1116 = vst [vmem:[#allocation7 + $0x10] sm:$0xff] %v1112
    %1117 = vst [vmem:[#allocation7 + $0x18] sm:$0xff] %v1113
    %v1118 = vmul.f32 %v1106, %v1102
    %v1119 = vmul.f32 %v1107, %v1103
    %v1120 = vmul.f32 %v1108, %v1104
    %v1121 = vmul.f32 %v1109, %v1105
    %1122 = vst [vmem:[#allocation8] sm:$0xff] %v1118
    %1123 = vst [vmem:[#allocation8 + $0x8] sm:$0xff] %v1119
    %1124 = vst [vmem:[#allocation8 + $0x10] sm:$0xff] %v1120
    %1125 = vst [vmem:[#allocation8 + $0x18] sm:$0xff] %v1121
    // Predicated region
    $region18: #{tpu_custom_call.1} parent=1 // pred_check
      _
    $region19: #{tpu_custom_call.1} parent=1 // pred_check_branch
      %1127 = sbr.rel (0) target = $region21
    $region20: #{tpu_custom_call.1} parent=1 // pred_region
      %s1129 = ssub.s32 512, 512
      %1130 = vsyncadd [#allocation6], %s1129
      %s1131 = sshll.u32 [#allocation7], 4
      %s1132 = int_to_ptr.vmem [resolvable:$true] %s1131
      %1137 = dma.vmem_to_hbm [thread:$0]  %s1132, 512, %s3, [#allocation6], 128, 128, 8
    $region21: #{tpu_custom_call.1} parent=1 // pred_fallthru
      _
    // Predicated region
    $region22: #{tpu_custom_call.1} parent=1 // pred_check
      _
    $region23: #{tpu_custom_call.1} parent=1 // pred_check_branch
      %1139 = sbr.rel (0) target = $region25
    $region24: #{tpu_custom_call.1} parent=1 // pred_region
      %s1141 = ssub.s32 512, 512
      %1142 = vsyncadd [#allocation9], %s1141
      %s1143 = sshll.u32 [#allocation8], 4
      %s1144 = int_to_ptr.vmem [resolvable:$true] %s1143
      %1149 = dma.vmem_to_hbm [thread:$0]  %s1144, 512, %s4, [#allocation9], 128, 128, 8
    $region25: #{tpu_custom_call.1} parent=1 // pred_fallthru
      _
    // Predicated region
    $region26: #{tpu_custom_call.1} parent=1 // pred_check
      _
    $region27: #{tpu_custom_call.1} parent=1 // pred_check_branch
      %1151 = sbr.rel (0) target = $region29
    $region28: #{tpu_custom_call.1} parent=1 // pred_region
      %1152 = dma.done [#allocation6], 512
    $region29: #{tpu_custom_call.1} parent=1 // pred_fallthru
      _
    // Predicated region
    $region30: #{tpu_custom_call.1} parent=1 // pred_check
      _
    $region31: #{tpu_custom_call.1} parent=1 // pred_check_branch
      %1154 = sbr.rel (0) target = $region33
    $region32: #{tpu_custom_call.1} parent=1 // pred_region
      %1155 = dma.done [#allocation9], 512
    $region33: #{tpu_custom_call.1} parent=1 // pred_fallthru
      _
    %1156 = vsyncpa [#allocation5], 1
    %1157 = vsyncpa [#allocation6], 1
    %1158 = vsyncpa [#allocation9], 1

</llo_original>
